<compile_context>
chip_gen: v7x
topology: tpu7x:2x2x1
jax: 0.10.0
libtpu: 0.0.40
codegen_flags: <defaults>
</compile_context>

<pallas_src>
import math

import jax
import jax.numpy as jnp
from jax.experimental import pallas as pl
from jax.experimental.pallas import tpu as pltpu


def _round_up(x, m):
    return ((x + m - 1) // m) * m


# ----------------------------------------------------------------------------
# Kernels.
# ----------------------------------------------------------------------------
def _merged_linear_kernel(x_ref, w_ref, b_ref, out_ref):
    """out = x @ W_merged + bias   (LoRA pre-folded into W at prepare time)."""
    x = x_ref[...].astype(w_ref.dtype)                           # cast in-kernel
    acc = jnp.dot(x, w_ref[...], preferred_element_type=jnp.float32)
    out_ref[...] = (acc + b_ref[...]).astype(out_ref.dtype)


def _adapter_linear_kernel(x_ref, w_ref, b_ref, a_ref, bb_ref, out_ref):
    """out = x @ W + bias + (x @ A) @ B   (adapter kept separate, e.g. training).

    For LoRA_qkv, A = [Aq | Av] (zero-padded to 128 cols) and B is the
    block-diagonal up-projection spanning the full (padded) qkv width, so the
    q/k/v slicing happens inside one lane-dense output store."""
    x = x_ref[...].astype(w_ref.dtype)
    base = jnp.dot(x, w_ref[...], preferred_element_type=jnp.float32)
    z = jnp.dot(x, a_ref[...], preferred_element_type=jnp.float32)
    lora = jnp.dot(z.astype(bb_ref.dtype), bb_ref[...],
                   preferred_element_type=jnp.float32)
    out_ref[...] = (base + b_ref[...] + lora).astype(out_ref.dtype)


# ----------------------------------------------------------------------------
# Forward wrapper shared by LoRA_qkv and LoraLinear.
# ----------------------------------------------------------------------------
def lora_forward(x, params, *, tm=512, out_dtype=jnp.bfloat16):
    """x: (..., din).  params: dict from a prepare_* function."""
    w_t = params["w"]            # (din, dout_pad)  bf16 (merged or base)
    bias = params["bias"]        # (1, dout_pad)    f32
    a_t = params["a"]            # (din, r_pad)     bf16 or None (merged)
    b_t = params["b"]            # (r_pad, dout_pad)bf16 or None (merged)
    dout = params["dout"]        # logical output width

    din, dout_p = w_t.shape
    orig_shape = x.shape
    assert orig_shape[-1] == din
    M = math.prod(orig_shape[:-1])
    x2 = x.reshape(M, din)       # metadata-only; no astype / pad in the wrapper

    # Big tile for MXU occupancy + fewer grid steps, clamped for tiny inputs.
    # Ragged last tile: Pallas masks OOB stores; no cross-row reduction here.
    tm_eff = min(tm, _round_up(M, 8))
    grid = (pl.cdiv(M, tm_eff),)

    merged = a_t is None
    r2 = 0 if merged else a_t.shape[1]
    xb = jnp.dtype(x.dtype).itemsize
    ob = jnp.dtype(out_dtype).itemsize
    wb = jnp.dtype(w_t.dtype).itemsize
    # Flat-sum VMEM estimate (incl. default double buffers) + headroom, capped
    # well under v7x's 64 MiB per-TC physical VMEM.
    vmem_bytes = 2 * (tm_eff * din * xb + tm_eff * dout_p * ob
                      + din * dout_p * wb + dout_p * 4
                      + din * r2 * wb + r2 * dout_p * wb)
    vmem_limit = int(min(max(2 * vmem_bytes, 16 * 1024 * 1024),
                         48 * 1024 * 1024))

    x_spec = pl.BlockSpec((tm_eff, din), lambda i: (i, 0))
    w_spec = pl.BlockSpec((din, dout_p), lambda i: (0, 0))      # resident
    bias_spec = pl.BlockSpec((1, dout_p), lambda i: (0, 0))     # resident
    out_spec = pl.BlockSpec((tm_eff, dout_p), lambda i: (i, 0))  # lane-dense

    if merged:
        kernel = _merged_linear_kernel
        in_specs = [x_spec, w_spec, bias_spec]
        args = (x2, w_t, bias)
    else:
        kernel = _adapter_linear_kernel
        a_spec = pl.BlockSpec((din, r2), lambda i: (0, 0))
        b_spec = pl.BlockSpec((r2, dout_p), lambda i: (0, 0))
        in_specs = [x_spec, w_spec, bias_spec, a_spec, b_spec]
        args = (x2, w_t, bias, a_t, b_t)

    out = pl.pallas_call(
        kernel,
        out_shape=jax.ShapeDtypeStruct((M, dout_p), out_dtype),
        grid=grid,
        in_specs=in_specs,
        out_specs=out_spec,
        compiler_params=pltpu.CompilerParams(
            dimension_semantics=("parallel",),
            vmem_limit_bytes=vmem_limit,
        ),
    )(*args)

    out = out.reshape(*orig_shape[:-1], dout_p)
    if dout_p != dout:
        out = out[..., :dout]    # drop zero-padded lane columns once
    return out


def lora_qkv_forward(x, prepared, *, tm=512, out_dtype=jnp.bfloat16):
    return lora_forward(x, prepared, tm=tm, out_dtype=out_dtype)


def lora_linear_forward(x, prepared, *, tm=512, out_dtype=jnp.bfloat16):
    return lora_forward(x, prepared, tm=tm, out_dtype=out_dtype)


# ----------------------------------------------------------------------------
# One-time parameter preparation (transpose, fuse, fold scaling, pad, cast).
# Weights come in PyTorch (out, in) convention.
# ----------------------------------------------------------------------------
def prepare_lora_qkv_params(wqkv, bqkv, a_q, b_q, a_v, b_v, *,
                            nh_kd, dh, rank, alpha,
                            compute_dtype=jnp.bfloat16, merge=True):
    scaling = alpha / rank
    out_dim, din = wqkv.shape
    assert out_dim == 2 * nh_kd + dh
    dout_p = _round_up(out_dim, 128)

    w_t = jnp.asarray(wqkv, jnp.float32).T                        # (din, out)
    bias = jnp.asarray(bqkv, jnp.float32).reshape(1, out_dim)

    # Fused down-projection [Aq | Av] and block-diagonal up-projection that
    # already spans the whole qkv width (scaling folded in), all in f32.
    a_cat = jnp.concatenate([jnp.asarray(a_q, jnp.float32).T,
                             jnp.asarray(a_v, jnp.float32).T], axis=1)
    b_blk = jnp.zeros((2 * rank, out_dim), jnp.float32)
    b_blk = b_blk.at[:rank, :nh_kd].set(jnp.asarray(b_q, jnp.float32).T * scaling)
    b_blk = b_blk.at[rank:, 2 * nh_kd:].set(jnp.asarray(b_v, jnp.float32).T * scaling)

    if merge:
        # Frozen-adapter inference: fold LoRA into the base weight (exact, f32).
        w_t = w_t + a_cat @ b_blk
        a_pad, b_pad = None, None
    else:
        r_pad = _round_up(2 * rank, 128)
        a_pad = (jnp.zeros((din, r_pad), jnp.float32)
                 .at[:, :2 * rank].set(a_cat).astype(compute_dtype))
        b_pad = (jnp.zeros((r_pad, dout_p), jnp.float32)
                 .at[:2 * rank, :out_dim].set(b_blk).astype(compute_dtype))

    w_pad = (jnp.zeros((din, dout_p), jnp.float32)
             .at[:, :out_dim].set(w_t).astype(compute_dtype))
    bias_pad = jnp.zeros((1, dout_p), jnp.float32).at[:, :out_dim].set(bias)
    return {"w": w_pad, "bias": bias_pad, "a": a_pad, "b": b_pad, "dout": out_dim}


def prepare_lora_linear_params(w, b, a, bw, *, rank, alpha,
                               compute_dtype=jnp.bfloat16, merge=True):
    scaling = alpha / rank
    dout, din = w.shape
    dout_p = _round_up(dout, 128)

    w_t = jnp.asarray(w, jnp.float32).T                           # (din, dout)
    bias = jnp.asarray(b, jnp.float32).reshape(1, dout)
    a_t = jnp.asarray(a, jnp.float32).T                           # (din, r)
    b_t = jnp.asarray(bw, jnp.float32).T * scaling                # (r, dout)

    if merge:
        w_t = w_t + a_t @ b_t
        a_pad, b_pad = None, None
    else:
        r_pad = _round_up(rank, 128)
        a_pad = (jnp.zeros((din, r_pad), jnp.float32)
                 .at[:, :rank].set(a_t).astype(compute_dtype))
        b_pad = (jnp.zeros((r_pad, dout_p), jnp.float32)
                 .at[:rank, :dout].set(b_t).astype(compute_dtype))

    w_pad = (jnp.zeros((din, dout_p), jnp.float32)
             .at[:, :dout].set(w_t).astype(compute_dtype))
    bias_pad = jnp.zeros((1, dout_p), jnp.float32).at[:, :dout].set(bias)
    return {"w": w_pad, "bias": bias_pad, "a": a_pad, "b": b_pad, "dout": dout}


# ----------------------------------------------------------------------------
# Pure-JAX references (semantics of the PyTorch modules, f32).
# ----------------------------------------------------------------------------
def lora_qkv_ref(x, wqkv, bqkv, a_q, b_q, a_v, b_v, *, nh_kd, dh, rank, alpha):
    scaling = alpha / rank
    qkv = x @ wqkv.T + bqkv
    q = qkv[..., :nh_kd] + (x @ a_q.T) @ b_q.T * scaling
    k = qkv[..., nh_kd:2 * nh_kd]
    v = qkv[..., 2 * nh_kd:] + (x @ a_v.T) @ b_v.T * scaling
    return jnp.concatenate([q, k, v], axis=-1)


def lora_linear_ref(x, w, b, a, bw, *, rank, alpha):
    scaling = alpha / rank
    return x @ w.T + b + (x @ a.T) @ bw.T * scaling


if __name__ == "__main__":
    # Small shapes consistent with the module:
    #   tokens x: (B, N, dim); qkv out = 2*nh_kd + dh; LoRA rank r.
    B, N, dim = 2, 8, 32
    nh_kd, dh = 32, 64
    rank, alpha = 16, 1.0
    qkv_out = 2 * nh_kd + dh            # 128
    dec_in, dec_out = 32, 64            # one mask-decoder linear (dout < 128)

    key = jax.random.PRNGKey(0)
    ks = jax.random.split(key, 12)

    # Deterministic synthetic parameters (PyTorch-convention (out, in) weights).
    # NOTE: reset_parameters() zeros the LoRA B matrices; we use small nonzero
    # values so the LoRA path is actually exercised numerically.
    x = jax.random.normal(ks[0], (B, N, dim), jnp.float32)
    wqkv = jax.random.normal(ks[1], (qkv_out, dim), jnp.float32) * 0.05
    bqkv = jax.random.normal(ks[2], (qkv_out,), jnp.float32) * 0.05
    a_q = jax.random.normal(ks[3], (rank, dim), jnp.float32) * 0.05
    b_q = jax.random.normal(ks[4], (nh_kd, rank), jnp.float32) * 0.05
    a_v = jax.random.normal(ks[5], (rank, dim), jnp.float32) * 0.05
    b_v = jax.random.normal(ks[6], (dh, rank), jnp.float32) * 0.05

    xd = jax.random.normal(ks[7], (B, N, dec_in), jnp.float32)
    w_dec = jax.random.normal(ks[8], (dec_out, dec_in), jnp.float32) * 0.05
    b_dec = jax.random.normal(ks[9], (dec_out,), jnp.float32) * 0.05
    a_dec = jax.random.normal(ks[10], (rank, dec_in), jnp.float32) * 0.05
    bw_dec = jax.random.normal(ks[11], (dec_out, rank), jnp.float32) * 0.05

    refs = {
        "qkv": lora_qkv_ref(x, wqkv, bqkv, a_q, b_q, a_v, b_v,
                            nh_kd=nh_kd, dh=dh, rank=rank, alpha=alpha),
        "dec": lora_linear_ref(xd, w_dec, b_dec, a_dec, bw_dec,
                               rank=rank, alpha=alpha),
    }

    for merge in (True, False):
        qkv_params = prepare_lora_qkv_params(
            wqkv, bqkv, a_q, b_q, a_v, b_v,
            nh_kd=nh_kd, dh=dh, rank=rank, alpha=alpha, merge=merge)
        dec_params = prepare_lora_linear_params(
            w_dec, b_dec, a_dec, bw_dec, rank=rank, alpha=alpha, merge=merge)

        out_qkv = jax.block_until_ready(lora_qkv_forward(x, qkv_params))
        out_dec = jax.block_until_ready(lora_linear_forward(xd, dec_params))

        assert out_qkv.shape == (B, N, qkv_out)
        assert out_dec.shape == (B, N, dec_out)
        # bf16 weights/output with f32 accumulation → loose tolerance vs f32 ref.
        assert jnp.allclose(out_qkv.astype(jnp.float32), refs["qkv"],
                            atol=5e-2, rtol=5e-2), (
            merge, float(jnp.max(jnp.abs(out_qkv.astype(jnp.float32) - refs["qkv"]))))
        assert jnp.allclose(out_dec.astype(jnp.float32), refs["dec"],
                            atol=5e-2, rtol=5e-2), (
            merge, float(jnp.max(jnp.abs(out_dec.astype(jnp.float32) - refs["dec"]))))

    print("KERNEL_OK")
</pallas_src>

<mosaic_0001>
module attributes {stable_mosaic.version = 11 : i64} {
  func.func @_merged_linear_kernel(%arg0: i32, %arg1: memref<16x32xf32, #tpu.memory_space<vmem>>, %arg2: memref<32x128xbf16, #tpu.memory_space<vmem>>, %arg3: memref<1x128xf32, #tpu.memory_space<vmem>>, %arg4: memref<16x128xbf16, #tpu.memory_space<vmem>>) attributes {dimension_semantics = [#tpu.dimension_semantics<parallel>], iteration_bounds = array<i64: 1>, scalar_prefetch = 0 : i64, scratch_operands = 0 : i64, tpu.core_type = #tpu.core_type<tc>, window_params = [{transform_indices = @transform_0, window_bounds = array<i64: 16, 32>}, {pipeline_mode = #tpu.pipeline_mode<synchronous>, transform_indices = @transform_1, window_bounds = array<i64: 32, 128>}, {pipeline_mode = #tpu.pipeline_mode<synchronous>, transform_indices = @transform_2, window_bounds = array<i64: 1, 128>}, {transform_indices = @transform_3, window_bounds = array<i64: 16, 128>}]} {
    %c0 = arith.constant 0 : index
    %c0_0 = arith.constant 0 : index
    %0 = vector.load %arg1[%c0, %c0_0] : memref<16x32xf32, #tpu.memory_space<vmem>>, vector<16x32xf32>
    %1 = arith.truncf %0 : vector<16x32xf32> to vector<16x32xbf16>
    %c0_1 = arith.constant 0 : index
    %c0_2 = arith.constant 0 : index
    %2 = vector.load %arg2[%c0_1, %c0_2] : memref<32x128xbf16, #tpu.memory_space<vmem>>, vector<32x128xbf16>
    %cst = arith.constant dense<0.000000e+00> : vector<16x128xf32>
    %3 = tpu.matmul %1, %2, %cst {dimension_numbers = #tpu.dot_dimension_numbers<[1], [0], [0], [1], [0, 0, 1, 1], [], []>} : vector<16x32xbf16>, vector<32x128xbf16>, vector<16x128xf32> -> vector<16x128xf32>
    %c0_3 = arith.constant 0 : index
    %c0_4 = arith.constant 0 : index
    %4 = vector.load %arg3[%c0_3, %c0_4] : memref<1x128xf32, #tpu.memory_space<vmem>>, vector<1x128xf32>
    %5 = vector.broadcast %4 : vector<1x128xf32> to vector<16x128xf32>
    %6 = arith.addf %3, %5 : vector<16x128xf32>
    %7 = arith.truncf %6 : vector<16x128xf32> to vector<16x128xbf16>
    %c0_5 = arith.constant 0 : index
    %c0_6 = arith.constant 0 : index
    %8 = vector.load %arg4[%c0_5, %c0_6] : memref<16x128xbf16, #tpu.memory_space<vmem>>, vector<16x128xbf16>
    tpu.vector_store %arg4[%c0_5, %c0_6], %7 {strides = array<i32>} : memref<16x128xbf16, #tpu.memory_space<vmem>>, vector<16x128xbf16>,
    return
  }
  func.func @transform_0(%arg0: i32) -> (i32, i32) {
    %c0_i32 = arith.constant 0 : i32
    %c0_i32_0 = arith.constant 0 : i32
    return %arg0, %c0_i32 : i32, i32
  }
  func.func @transform_1(%arg0: i32) -> (i32, i32) {
    %c0_i32 = arith.constant 0 : i32
    %c0_i32_0 = arith.constant 0 : i32
    %c0_i32_1 = arith.constant 0 : i32
    return %c0_i32, %c0_i32_0 : i32, i32
  }
  func.func @transform_2(%arg0: i32) -> (i32, i32) {
    %c0_i32 = arith.constant 0 : i32
    %c0_i32_0 = arith.constant 0 : i32
    %c0_i32_1 = arith.constant 0 : i32
    return %c0_i32, %c0_i32_0 : i32, i32
  }
  func.func @transform_3(%arg0: i32) -> (i32, i32) {
    %c0_i32 = arith.constant 0 : i32
    %c0_i32_0 = arith.constant 0 : i32
    return %arg0, %c0_i32 : i32, i32
  }
}

</mosaic_0001>

<llo_original>
// kernel: tpu_custom_call.1
$region0: #{tpu_custom_call.1}
  #allocation0 [shape = 'u32[]', space=smem, size = 0x4, offset = 0x4, fixed_abs, tag = 'smem constant byte address 0x4 - core index']
  #allocation1 [shape = 'u32[144,128]{1,0:T(1,128)}', space=vmem, size = 0x12000, scoped, tag = 'internal scratch']
  %s0 = inlined_call_operand.hbm [shape: f32[16,32], index: 0, kind: input, shape index: {}]
  %s1 = inlined_call_operand.hbm [shape: bf16[32,128], index: 1, kind: input, shape index: {}]
  %s2 = inlined_call_operand.vmem [shape: f32[1,128], index: 2, kind: input, shape index: {}]
  %s3 = inlined_call_operand.hbm [shape: bf16[16,128], index: 3, kind: output, shape index: {}]
  %s4 = sld [smem:[#allocation0]]
  $region30: #{tpu_custom_call.1} parent=0
    _
  %s6 = ssub.s32 1, %s4
  %s7 = scalar_select 0, %s6, %s4
  $region1: #{tpu_custom_call.1} parent=0
    #allocation2 [shape = 'u8[8192]{0}', space=vmem, size = 0x2000, scoped, tag = 'input window, operand 0, single buffered']
    #allocation3 [shape = 's32[1]{0}', space=sflag, size = 0x4, scoped, tag = 'scoped memory for tpu_custom_call.1']
    #allocation4 [shape = 's32[1]{0}', space=sflag, size = 0x4, scoped, tag = 'scoped memory for tpu_custom_call.1']
    #allocation5 [shape = 'u8[8192]{0}', space=vmem, size = 0x2000, scoped, tag = 'input window, operand 1, single buffered']
    #allocation6 [shape = 's32[1]{0}', space=sflag, size = 0x4, scoped, tag = 'scoped memory for tpu_custom_call.1']
    #allocation7 [shape = 'u8[4096]{0}', space=vmem, size = 0x1000, scoped, tag = 'output window, operand 0, single buffered']
    %8 = vsyncpa [#allocation3], 0
    %9 = vsyncpa [#allocation6], 0
    %10 = vsyncpa [#allocation4], 0
    // Predicated region
    $region2: #{tpu_custom_call.1} parent=1 // pred_check
      _
    $region3: #{tpu_custom_call.1} parent=1 // pred_check_branch
      %12 = sbr.rel (0) target = $region5
    $region4: #{tpu_custom_call.1} parent=1 // pred_region
      %s14 = ssub.s32 256, 256
      %15 = vsyncadd [#allocation3], %s14
      %s16 = sshll.u32 [#allocation2], 4
      %s17 = int_to_ptr.vmem [resolvable:$true] %s16
      %22 = dma.hbm_to_vmem [thread:$0]  %s0, 256, %s17, [#allocation3], 128, 128, 8
    $region5: #{tpu_custom_call.1} parent=1 // pred_fallthru
      _
    // Predicated region
    $region6: #{tpu_custom_call.1} parent=1 // pred_check
      _
    $region7: #{tpu_custom_call.1} parent=1 // pred_check_branch
      %24 = sbr.rel (0) target = $region9
    $region8: #{tpu_custom_call.1} parent=1 // pred_region
      %s26 = ssub.s32 256, 256
      %27 = vsyncadd [#allocation6], %s26
      %s28 = sshll.u32 [#allocation5], 4
      %s29 = int_to_ptr.vmem [resolvable:$true] %s28
      %34 = dma.hbm_to_vmem [thread:$0]  %s1, 256, %s29, [#allocation6], 64, 64, 4
    $region9: #{tpu_custom_call.1} parent=1 // pred_fallthru
      _
    // Predicated region
    $region10: #{tpu_custom_call.1} parent=1 // pred_check
      _
    $region11: #{tpu_custom_call.1} parent=1 // pred_check_branch
      %36 = sbr.rel (0) target = $region13
    $region12: #{tpu_custom_call.1} parent=1 // pred_region
      _
    $region13: #{tpu_custom_call.1} parent=1 // pred_fallthru
      _
    // Predicated region
    $region14: #{tpu_custom_call.1} parent=1 // pred_check
      _
    $region15: #{tpu_custom_call.1} parent=1 // pred_check_branch
      %38 = sbr.rel (0) target = $region17
    $region16: #{tpu_custom_call.1} parent=1 // pred_region
      %39 = dma.done [#allocation3], 256
    $region17: #{tpu_custom_call.1} parent=1 // pred_fallthru
      _
    // Predicated region
    $region18: #{tpu_custom_call.1} parent=1 // pred_check
      _
    $region19: #{tpu_custom_call.1} parent=1 // pred_check_branch
      %41 = sbr.rel (0) target = $region21
    $region20: #{tpu_custom_call.1} parent=1 // pred_region
      %42 = dma.done [#allocation6], 256
    $region21: #{tpu_custom_call.1} parent=1 // pred_fallthru
      _
    %v44 = vld [vmem:[#allocation2] sm:$0xff]
    %v45 = vld [vmem:[#allocation2 + $0x8] sm:$0xff]
    %v46 = vpack.c.bf16 %v45, %v44
    %v47 = vld [vmem:[#allocation5] sm:$0xf]
    %v48 = vld [vmem:[#allocation5 + $0x4] sm:$0xf]
    %v49 = vld [vmem:[#allocation5 + $0x8] sm:$0xf]
    %v50 = vld [vmem:[#allocation5 + $0xc] sm:$0xf]
    %v51 = vld [vmem:[%s2] sm:$0x1]
    %v53 = vlaneseq
    %v54 = vshrl.u32 %v53, 7
    %v55 = vsub.s32 0, %v54
    %v56 = vrot.slane %v51, %v55
    %v62 = vunpack.c.l.b16 %v47
    %v63 = vunpack.c.l.b16 %v48
    %v64 = vunpack.c.l.b16 %v49
    %v65 = vunpack.c.l.b16 %v50
    %v66 = vpack.c.b16 %v63, %v62
    %v67 = vpack.c.b16 %v65, %v64
    %vm70 = vcmask 261120
    %v72 = vsel %vm70, %v46, 0
    %74 = vmatprep.subr.bf16.mxu0 0
    %75 = vmatpush1.bf16.msra.mxu0 %v66
    %76 = vmatprep.subr.bf16.mxu0 0
    %77 = vmatpush1.bf16.msra.mxu0 %v67
    %78 = vmatprep.subr.bf16.mxu0 0
    %79 = vmatpush1.bf16.msra.mxu0 0
    %80 = vmatprep.subr.bf16.mxu0 0
    %81 = vmatpush1.bf16.msra.mxu0 0
    %82 = vmatprep.subr.bf16.mxu0 0
    %83 = vmatpush1.bf16.msra.mxu0 0
    %84 = vmatprep.subr.bf16.mxu0 0
    %85 = vmatpush1.bf16.msra.mxu0 0
    %86 = vmatprep.subr.bf16.mxu0 0
    %87 = vmatpush1.bf16.msra.mxu0 0
    %88 = vmatprep.subr.bf16.mxu0 0
    %89 = vmatpush1.bf16.msra.mxu0 0
    %90 = vmatprep.subr.bf16.mxu0 0
    %91 = vmatpush1.bf16.msra.mxu0 0
    %92 = vmatprep.subr.bf16.mxu0 0
    %93 = vmatpush1.bf16.msra.mxu0 0
    %94 = vmatprep.subr.bf16.mxu0 0
    %95 = vmatpush1.bf16.msra.mxu0 0
    %96 = vmatprep.subr.bf16.mxu0 0
    %97 = vmatpush1.bf16.msra.mxu0 0
    %98 = vmatprep.subr.bf16.mxu0 0
    %99 = vmatpush1.bf16.msra.mxu0 0
    %100 = vmatprep.subr.bf16.mxu0 0
    %101 = vmatpush1.bf16.msra.mxu0 0
    %102 = vmatprep.subr.bf16.mxu0 0
    %103 = vmatpush1.bf16.msra.mxu0 0
    %104 = vmatprep.subr.bf16.mxu0 0
    %105 = vmatpush1.bf16.msra.mxu0 0
    %106 = vmatprep.mubr.bf16.mxu0 0
    %107 = vmatmul.mubr.bf16.gmra.mrb[0].mxu0 %v72
    %v108 = vpop.f32.mrb[0].mxu0
    %v109 = vadd.f32 %v56, %v108
    %v110 = vpop.f32.mrb[0].mxu0
    %v111 = vpop.f32.mrb[0].mxu0
    %v112 = vadd.f32 %v56, %v111
    %v113 = vpop.f32.mrb[0].mxu0
    %114 = vdwg.mxu0
    %v115 = vpack.c.bf16 %v112, %v109
    %v117 = vunpack.c.l.b16 %v115
    %v118 = vunpack.c.h.b16 %v115
    %v119 = vpack.c.b16 %v117, %v117
    %v120 = vpack.c.b16 %v118, %v118
    %123 = vst [vmem:[#allocation7] sm:$0xf] %v119
    %124 = vst [vmem:[#allocation7 + $0x4] sm:$0xf] %v120
    // Predicated region
    $region22: #{tpu_custom_call.1} parent=1 // pred_check
      _
    $region23: #{tpu_custom_call.1} parent=1 // pred_check_branch
      %126 = sbr.rel (0) target = $region25
    $region24: #{tpu_custom_call.1} parent=1 // pred_region
      %s128 = ssub.s32 128, 128
      %129 = vsyncadd [#allocation4], %s128
      %s130 = sshll.u32 [#allocation7], 4
      %s131 = int_to_ptr.vmem [resolvable:$true] %s130
      %136 = dma.vmem_to_hbm [thread:$0]  %s131, 128, %s3, [#allocation4], 64, 64, 4
    $region25: #{tpu_custom_call.1} parent=1 // pred_fallthru
      _
    // Predicated region
    $region26: #{tpu_custom_call.1} parent=1 // pred_check
      _
    $region27: #{tpu_custom_call.1} parent=1 // pred_check_branch
      %138 = sbr.rel (0) target = $region29
    $region28: #{tpu_custom_call.1} parent=1 // pred_region
      %139 = dma.done [#allocation4], 128
    $region29: #{tpu_custom_call.1} parent=1 // pred_fallthru
      _
    %140 = vsyncpa [#allocation3], 1
    %141 = vsyncpa [#allocation6], 1
    %142 = vsyncpa [#allocation4], 1

</llo_original>
